<compile_context>
chip_gen: v6e
topology: v6e:2x2x1
jax: 0.10.0
libtpu: 0.0.40
codegen_flags: <defaults>
</compile_context>

<pallas_src>
import jax
import jax.numpy as jnp
from jax.experimental import pallas as pl
from jax.experimental.pallas import tpu as pltpu


class BaseNetConfig:
    def __init__(self, num_channels: int = 256, dropout: float = 0.3,
                 linear_hidden=(256, 128)):
        self.num_channels = num_channels
        self.linear_hidden = list(linear_hidden)
        self.dropout = dropout


# ---------------------------------------------------------------------------
# Pallas kernel: identity pass-through as a single HBM->HBM DMA.
# Zero vregs, zero VMEM staging, zero TensorCore load/store work.
# ---------------------------------------------------------------------------
def _identity_copy_kernel(s_ref, o_ref, sem):
    cp = pltpu.make_async_copy(s_ref, o_ref, sem)
    cp.start()
    cp.wait()


@jax.jit
def _pallas_identity(s: jax.Array) -> jax.Array:
    """Identity copy through a Pallas TPU kernel (one HBM->HBM DMA).

    Both operands stay in-place (pl.ANY); the kernel body issues a single DMA
    from the input ref to the output ref. Works for any shape/dtype/size with
    no scoped-VMEM footprint, so no tiling or per-generation sizing is needed.
    """
    return pl.pallas_call(
        _identity_copy_kernel,
        out_shape=jax.ShapeDtypeStruct(s.shape, s.dtype),
        in_specs=[pl.BlockSpec(memory_space=pl.ANY)],
        out_specs=pl.BlockSpec(memory_space=pl.ANY),
        scratch_shapes=[pltpu.SemaphoreType.DMA(())],
    )(s)


class MyNet:
    """JAX/Pallas port of the PyTorch MyNet module.

    __init__ registers no parameters (matching the reference: the nn.Module
    defines none). forward(s) returns (None, None), matching the reference
    exactly — no kernel work and no host sync on the forward path.
    """

    def __init__(self, observation_size, action_space_size, config: BaseNetConfig):
        self.observation_size = observation_size
        self.action_space_size = action_space_size
        self.config = config
        # No parameters to initialize — the reference module defines none.

    def forward(self, s: jax.Array):
        # Reference forward ignores `s` entirely and returns (None, None).
        return (None, None)

    __call__ = forward


if __name__ == "__main__":
    key = jax.random.PRNGKey(0)

    # Small shapes consistent with a board-game observation: batch=2,
    # channels=4, spatial 16x16 (NCHW).
    batch, channels, height, width = 2, 4, 16, 16
    s = jax.random.normal(key, (batch, channels, height, width), dtype=jnp.float32)

    config = BaseNetConfig(num_channels=32, dropout=0.3, linear_hidden=[32, 16])
    net = MyNet(observation_size=(height, width), action_space_size=height * width + 1,
                config=config)

    pi, v = net(s)
    assert pi is None and v is None, "forward must return (None, None)"

    # Exercise the Pallas identity kernel on TPU and verify the copy.
    out = jax.block_until_ready(_pallas_identity(s))
    assert out.shape == s.shape
    assert out.dtype == s.dtype
    assert jnp.array_equal(out, s)

    print("KERNEL_OK")
</pallas_src>

<mosaic_0001>
module attributes {stable_mosaic.version = 11 : i64} {
  func.func @_identity_copy_kernel(%arg0: memref<2x4x16x16xf32, #tpu.memory_space<any>>, %arg1: memref<2x4x16x16xf32, #tpu.memory_space<any>>, %arg2: memref<!tpu.dma_semaphore, #tpu.memory_space<semaphore_mem>>) attributes {dimension_semantics = [], scalar_prefetch = 0 : i64, scratch_operands = 1 : i64, tpu.core_type = #tpu.core_type<tc>} {
    tpu.enqueue_dma source(%arg0 : memref<2x4x16x16xf32, #tpu.memory_space<any>>) target(%arg1 : memref<2x4x16x16xf32, #tpu.memory_space<any>>) target_semaphore(%arg2 : memref<!tpu.dma_semaphore, #tpu.memory_space<semaphore_mem>>)
    tpu.wait_dma2 semaphore(%arg2 : memref<!tpu.dma_semaphore, #tpu.memory_space<semaphore_mem>>) src(%arg0 : memref<2x4x16x16xf32, #tpu.memory_space<any>>) dst(%arg1 : memref<2x4x16x16xf32, #tpu.memory_space<any>>)
    return
  }
}

</mosaic_0001>

<llo_original>
// kernel: _pallas_identity.1
$region0: #{_pallas_identity.1}
  #allocation0 [shape = 'u32[]', space=smem, size = 0x4, offset = 0x4, fixed_abs, tag = 'smem constant byte address 0x4 - core index']
  #allocation1 [shape = 'u32[144,128]{1,0:T(1,128)}', space=vmem, size = 0x12000, scoped, tag = 'internal scratch']
  #allocation2 [shape = 's32[1]{0}', space=sflag, size = 0x4, scoped, tag = 'scratch operand']
  #allocation3 [shape = 's32[]', space=sflag, size = 0x4, offset = 0, fixed_abs, tag = 'sflag constant byte address 0x0 - dummy sync flag']
  #allocation4 [shape = 'u32[0]{0}', space=smem, size = 0, offset = 0, fixed_abs, tag = 'smem constant byte address 0x0 - null']
  %s0 = inlined_call_operand.hbm [shape: f32[2,4,16,16], index: 0, kind: input, shape index: {}]
  %s1 = inlined_call_operand.hbm [shape: f32[2,4,16,16], index: 1, kind: output, shape index: {}]
  %s2 = sld [smem:[#allocation0]]
  $region2: #{_pallas_identity.1} parent=0
    _
  %s4 = ssub.s32 1, %s2
  %s5 = scalar_select 0, %s4, %s2
  %s7 = sshll.u32 1, 14
  %s8 = sxor.u32 4294967295, %s7
  %12 = dma.general %s0, 2048, %s1, [#allocation2], 131072, [#allocation4], 0, 0
  %s13 = smul.u32 2, 4
  %s14 = smul.u32 %s13, 16
  %s15 = smul.u32 %s14, 1
  %s16 = sshll.u32 %s15, 4
  %17 = dma.done [#allocation2], %s16
  %18 = vsyncmov [#allocation2]
  %s19 = vpop.sfrf %18
  %p20 = scmp.eq.s32.totalorder %s19, 0
  %p21 = pneg %p20
  %23 = shalt.err (%p21)

</llo_original>
